<compile_context>
chip_gen: v5e
topology: v5e:2x2
jax: 0.10.0
libtpu: 0.0.40
codegen_flags: <defaults>
</compile_context>

<pallas_src>
import functools

import jax
import jax.numpy as jnp
from jax.experimental import pallas as pl
from jax.experimental.pallas import tpu as pltpu


# Conservative VMEM budget for the streamed (double-buffered) row tiles; leaves
# ample headroom for the resident weight and compiler scratch on every generation
# (v5e/v6e: 128 MiB physical, v7x: 64 MiB physical / 32 MiB default scoped).
_TILE_VMEM_BUDGET = 16 << 20


def _rgcn_post_kernel(h_ref, w_ref, b_ref, o_ref):
    """One node tile: out = relu(h @ W_t + b_combined)  (f32 accumulate)."""
    y = jnp.dot(h_ref[...], w_ref[...], preferred_element_type=jnp.float32)
    y = y + b_ref[...].astype(jnp.float32)
    o_ref[...] = jnp.maximum(y, 0.0).astype(o_ref.dtype)   # activation = ReLU


def prepare_rgcn_line_params(rgcn_bias, line_weight, line_bias):
    """One-time per-layer prep (hoisted out of the per-forward path).

    rgcn_bias   : (D,)    RGCNLayer.bias (pass zeros if bias=None)
    line_weight : (D, D)  nn.Linear weight, PyTorch (out_features, in_features) layout
    line_bias   : (D,)    nn.Linear bias
    returns     : w_t (D, D) in (in, out) layout, b_combined (D,)
    """
    w_t = jnp.transpose(line_weight)                       # (in, out)
    # relu((h + b) @ W.T + bl) == relu(h @ W.T + (b @ W.T + bl))
    b_combined = (rgcn_bias.astype(jnp.float32) @ w_t.astype(jnp.float32)
                  + line_bias.astype(jnp.float32))
    return w_t, b_combined


def _pick_row_tile(n_rows, feat_dim, in_itemsize, out_itemsize, requested):
    """Sublane-aligned row tile: big enough to amortise per-step overhead, but
    always >= 2 grid steps (so v7x's two TCs both get work) and within the
    VMEM budget for the double-buffered in+out tiles."""
    if n_rows <= 8:
        return n_rows
    tn = max(8, (min(requested, n_rows) // 8) * 8)
    tn = min(tn, max(8, (n_rows // 2 // 8) * 8))           # >= 2 grid steps
    while tn > 8 and 2 * tn * feat_dim * (in_itemsize + out_itemsize) > _TILE_VMEM_BUDGET:
        tn = max(8, (tn // 2 // 8) * 8)
    return tn


@functools.partial(jax.jit, static_argnames=("tile_n",))
def rgcn_layer_forward(h, w_t, b_combined, *, tile_n=4096):
    """Fused RGCNLayer post-propagate forward:  relu(h @ W_t + b_combined).

    h          : (N, D)  node features g.ndata['h'] after propagate()
    w_t        : (D, D)  pre-transposed Linear weight, (in, out) layout
    b_combined : (D,)    rgcn_bias @ W.T + line_bias   (see prepare_rgcn_line_params)
    returns    : (N, D)  in h.dtype
    """
    N, D = h.shape
    assert w_t.shape == (D, D) and b_combined.shape == (D,)
    out_dtype = h.dtype

    # Pad the feature dim to a multiple of 128 so loads/stores stay lane-dense
    # (full vst, no masked partial stores); padded output columns are relu(0)=0
    # and get sliced away.
    Dp = pl.cdiv(D, 128) * 128
    if Dp != D:
        h = jnp.pad(h, ((0, 0), (0, Dp - D)))
        w_t = jnp.pad(w_t, ((0, Dp - D), (0, Dp - D)))
        b_combined = jnp.pad(b_combined, (0, Dp - D))
    b2d = b_combined.reshape(1, Dp)

    in_isz = jnp.dtype(h.dtype).itemsize
    out_isz = jnp.dtype(out_dtype).itemsize
    tn = _pick_row_tile(N, Dp, in_isz, out_isz, tile_n)
    grid = (pl.cdiv(N, tn),)

    # Actual VMEM footprint (double-buffered streamed tiles + resident weight/bias)
    # plus headroom — never request v7x's entire 64 MiB physical VMEM.
    vmem_bytes = (2 * tn * Dp * (in_isz + out_isz)
                  + Dp * Dp * jnp.dtype(w_t.dtype).itemsize
                  + Dp * jnp.dtype(b2d.dtype).itemsize)
    vmem_limit = int(min(vmem_bytes + (8 << 20), 32 << 20))

    cost = pl.CostEstimate(
        flops=2 * N * Dp * Dp,
        transcendentals=0,
        bytes_accessed=N * Dp * (in_isz + out_isz)
                       + Dp * Dp * jnp.dtype(w_t.dtype).itemsize
                       + Dp * jnp.dtype(b2d.dtype).itemsize,
    )

    out = pl.pallas_call(
        _rgcn_post_kernel,
        out_shape=jax.ShapeDtypeStruct((N, Dp), out_dtype),
        grid_spec=pltpu.PrefetchScalarGridSpec(
            num_scalar_prefetch=0,
            grid=grid,
            in_specs=[
                pl.BlockSpec((tn, Dp), lambda i: (i, 0)),   # node-feature tile (streamed)
                pl.BlockSpec((Dp, Dp), lambda i: (0, 0)),   # W_t               (resident)
                pl.BlockSpec((1, Dp), lambda i: (0, 0)),    # combined bias     (resident)
            ],
            out_specs=pl.BlockSpec((tn, Dp), lambda i: (i, 0)),
        ),
        compiler_params=pltpu.CompilerParams(
            dimension_semantics=("parallel",),              # node axis is independent
            vmem_limit_bytes=vmem_limit,
        ),
        cost_estimate=cost,
    )(h, w_t, b2d)

    return out[:, :D] if Dp != D else out


def _reference(h, rgcn_bias, line_weight, line_bias):
    """Pure-JAX reference of the same forward pass (f32)."""
    h32 = h.astype(jnp.float32)
    return jnp.maximum(
        (h32 + rgcn_bias.astype(jnp.float32)) @ line_weight.astype(jnp.float32).T
        + line_bias.astype(jnp.float32),
        0.0,
    )


if __name__ == "__main__":
    key = jax.random.PRNGKey(0)
    k1, k2, k3, k4 = jax.random.split(key, 4)

    # ---- test 1: f32, lane-dense D (N=64 nodes, out_dim=128) -------------------
    N, D = 64, 128
    h = jax.random.normal(k1, (N, D), dtype=jnp.float32)                 # g.ndata['h']
    rgcn_bias = 0.1 * jax.random.normal(k2, (D,), dtype=jnp.float32)     # RGCNLayer.bias
    line_weight = jax.random.normal(k3, (D, D), dtype=jnp.float32) / jnp.sqrt(D)
    line_bias = 0.1 * jax.random.normal(k4, (D,), dtype=jnp.float32)

    w_t, b_comb = prepare_rgcn_line_params(rgcn_bias, line_weight, line_bias)
    out = rgcn_layer_forward(h, w_t, b_comb)
    jax.block_until_ready(out)
    ref = _reference(h, rgcn_bias, line_weight, line_bias)
    assert out.shape == ref.shape and out.dtype == h.dtype
    assert bool(jnp.allclose(out, ref, atol=1e-4, rtol=1e-4)), "f32 mismatch"

    # ---- test 2: bf16 streaming (halved HBM traffic), ragged N, non-128 D ------
    N2, D2 = 37, 96
    h2 = jax.random.normal(k1, (N2, D2), dtype=jnp.float32).astype(jnp.bfloat16)
    b2 = (0.1 * jax.random.normal(k2, (D2,), dtype=jnp.float32)).astype(jnp.bfloat16)
    w2 = (jax.random.normal(k3, (D2, D2), dtype=jnp.float32)
          / jnp.sqrt(D2)).astype(jnp.bfloat16)
    bl2 = (0.1 * jax.random.normal(k4, (D2,), dtype=jnp.float32)).astype(jnp.bfloat16)

    w2_t, b2_comb = prepare_rgcn_line_params(b2, w2, bl2)
    out2 = rgcn_layer_forward(h2, w2_t, b2_comb)
    jax.block_until_ready(out2)
    ref2 = _reference(h2, b2, w2, bl2)
    assert out2.shape == (N2, D2) and out2.dtype == jnp.bfloat16
    assert bool(jnp.allclose(out2.astype(jnp.float32), ref2, atol=5e-2, rtol=5e-2)), \
        "bf16 mismatch"

    print("KERNEL_OK")
</pallas_src>

<mosaic_0001>
module attributes {stable_mosaic.version = 11 : i64} {
  func.func @_rgcn_post_kernel(%arg0: i32, %arg1: memref<32x128xf32, #tpu.memory_space<vmem>>, %arg2: memref<128x128xf32, #tpu.memory_space<vmem>>, %arg3: memref<1x128xf32, #tpu.memory_space<vmem>>, %arg4: memref<32x128xf32, #tpu.memory_space<vmem>>) attributes {dimension_semantics = [#tpu.dimension_semantics<parallel>], iteration_bounds = array<i64: 2>, scalar_prefetch = 0 : i64, scratch_operands = 0 : i64, tpu.core_type = #tpu.core_type<tc>, window_params = [{transform_indices = @transform_0, window_bounds = array<i64: 32, 128>}, {pipeline_mode = #tpu.pipeline_mode<synchronous>, transform_indices = @transform_1, window_bounds = array<i64: 128, 128>}, {pipeline_mode = #tpu.pipeline_mode<synchronous>, transform_indices = @transform_2, window_bounds = array<i64: 1, 128>}, {transform_indices = @transform_3, window_bounds = array<i64: 32, 128>}]} {
    %c0 = arith.constant 0 : index
    %c0_0 = arith.constant 0 : index
    %0 = vector.load %arg1[%c0, %c0_0] : memref<32x128xf32, #tpu.memory_space<vmem>>, vector<32x128xf32>
    %c0_1 = arith.constant 0 : index
    %c0_2 = arith.constant 0 : index
    %1 = vector.load %arg2[%c0_1, %c0_2] : memref<128x128xf32, #tpu.memory_space<vmem>>, vector<128x128xf32>
    %cst = arith.constant dense<0.000000e+00> : vector<32x128xf32>
    %2 = tpu.matmul %0, %1, %cst {dimension_numbers = #tpu.dot_dimension_numbers<[1], [0], [0], [1], [0, 0, 1, 1], [], []>} : vector<32x128xf32>, vector<128x128xf32>, vector<32x128xf32> -> vector<32x128xf32>
    %c0_3 = arith.constant 0 : index
    %c0_4 = arith.constant 0 : index
    %3 = vector.load %arg3[%c0_3, %c0_4] : memref<1x128xf32, #tpu.memory_space<vmem>>, vector<1x128xf32>
    %4 = vector.broadcast %3 : vector<1x128xf32> to vector<32x128xf32>
    %5 = arith.addf %2, %4 : vector<32x128xf32>
    %cst_5 = arith.constant 0.000000e+00 : f32
    %6 = vector.broadcast %cst_5 : f32 to vector<32x128xf32>
    %7 = arith.maximumf %5, %6 : vector<32x128xf32>
    %c0_6 = arith.constant 0 : index
    %c0_7 = arith.constant 0 : index
    %8 = vector.load %arg4[%c0_6, %c0_7] : memref<32x128xf32, #tpu.memory_space<vmem>>, vector<32x128xf32>
    tpu.vector_store %arg4[%c0_6, %c0_7], %7 {strides = array<i32>} : memref<32x128xf32, #tpu.memory_space<vmem>>, vector<32x128xf32>,
    return
  }
  func.func @transform_0(%arg0: i32) -> (i32, i32) {
    %c0_i32 = arith.constant 0 : i32
    %c0_i32_0 = arith.constant 0 : i32
    return %arg0, %c0_i32 : i32, i32
  }
  func.func @transform_1(%arg0: i32) -> (i32, i32) {
    %c0_i32 = arith.constant 0 : i32
    %c0_i32_0 = arith.constant 0 : i32
    %c0_i32_1 = arith.constant 0 : i32
    return %c0_i32, %c0_i32_0 : i32, i32
  }
  func.func @transform_2(%arg0: i32) -> (i32, i32) {
    %c0_i32 = arith.constant 0 : i32
    %c0_i32_0 = arith.constant 0 : i32
    %c0_i32_1 = arith.constant 0 : i32
    return %c0_i32, %c0_i32_0 : i32, i32
  }
  func.func @transform_3(%arg0: i32) -> (i32, i32) {
    %c0_i32 = arith.constant 0 : i32
    %c0_i32_0 = arith.constant 0 : i32
    return %arg0, %c0_i32 : i32, i32
  }
}

</mosaic_0001>

<llo_original>
// kernel: rgcn_layer_forward.1
$region0: #{rgcn_layer_forward.1}
  #allocation0 [shape = 'u32[]', space=smem, size = 0x4, offset = 0x4, fixed_abs, tag = 'smem constant byte address 0x4 - core index']
  #allocation1 [shape = 'u32[72,128]{1,0:T(1,128)}', space=vmem, size = 0x9000, scoped, tag = 'internal scratch']
  %s0 = inlined_call_operand.hbm [shape: f32[64,128], index: 0, kind: input, shape index: {}]
  %s1 = inlined_call_operand.hbm [shape: f32[128,128], index: 1, kind: input, shape index: {}]
  %s2 = inlined_call_operand.vmem [shape: f32[1,128], index: 2, kind: input, shape index: {}]
  %s3 = inlined_call_operand.hbm [shape: f32[64,128], index: 3, kind: output, shape index: {}]
  %s4 = sld [smem:[#allocation0]]
  $region53: #{rgcn_layer_forward.1} parent=0
    _
  %s6 = ssub.s32 1, %s4
  %s7 = scalar_select 0, %s6, %s4
  $region1: #{rgcn_layer_forward.1} parent=0
    #allocation2 [shape = 'u8[32768]{0}', space=vmem, size = 0x8000, scoped, tag = 'input window, operand 0']
    #allocation3 [shape = 's32[2]{0}', space=sflag, size = 0x8, scoped, tag = 'scoped memory for rgcn_layer_forward.1']
    #allocation4 [shape = 's32[2]{0}', space=sflag, size = 0x8, scoped, tag = 'scoped memory for rgcn_layer_forward.1']
    #allocation5 [shape = 'u8[65536]{0}', space=vmem, size = 0x10000, scoped, tag = 'input window, operand 1, single buffered']
    #allocation6 [shape = 's32[1]{0}', space=sflag, size = 0x4, scoped, tag = 'scoped memory for rgcn_layer_forward.1']
    #allocation7 [shape = 'u8[32768]{0}', space=vmem, size = 0x8000, scoped, tag = 'output window, operand 0']
    %8 = vsyncpa [#allocation3], 0
    %s9 = scalar_lea.sflag [#allocation3], 1
    %10 = vsyncpa %s9, 0
    %11 = vsyncpa [#allocation6], 0
    %12 = vsyncpa [#allocation4], 0
    %s13 = scalar_lea.sflag [#allocation4], 1
    %14 = vsyncpa %s13, 0
    loop: start=0, step=1, limit=4
    $region2: #{rgcn_layer_forward.1} parent=1 // loop_pre_header
      _
    $region3: #{rgcn_layer_forward.1} parent=1 // loop_header
      %s16 = sphi 0, %s20
      %p17 = scmp.ge.s32.totalorder %s16, 4
      %s26 = sphi 0, %s28
      %s29 = sphi 0, %s26
      %s30 = sphi 0, %s29
      %s46 = sphi 0, %s30
      %s50 = sphi 0, %s50
      %s52 = sphi 0, %s50
      %s53 = sphi 0, %s52
      %s67 = sphi 0, %s53
      %s71 = sphi 0, %s71
      %s73 = sphi 0, %s71
      %s74 = sphi 0, %s73
      %s88 = sphi 0, %s74
      %s94 = sphi 0, %s96
      %s97 = sphi 0, %s94
      %s98 = sphi 0, %s97
      %s114 = sphi 0, %s98
    $region4: #{rgcn_layer_forward.1} parent=1 // loop_header_branch
      %19 = sbr.rel (%p17) target = $region8
    $region5: #{rgcn_layer_forward.1} parent=1 // loop_body
      %s21 = ssub.s32 %s16, 1
      %s22 = ssub.s32 %s16, 2
      %s23 = sadd.s32 %s16, 1
      %s24 = ssub.s32 %s16, %s23
      %p25 = scmp.eq.s32.totalorder %s24, 0
      %s27 = sadd.s32 %s26, 1
      %s28 = scalar_select %p25, %s26, %s27
      %p31 = pneg %p25
      %p32 = scmp.eq.s32.totalorder %s16, 1
      %p33 = por %p31, %p32
      %p34 = scmp.ne.s32.totalorder %s26, %s29
      %p35 = scmp.eq.s32.totalorder %s16, 0
      %p36 = por %p34, %p35
      %p37 = scmp.ne.s32.totalorder %s26, %s29
      %p38 = scmp.eq.s32.totalorder %s21, 1
      %p39 = por %p37, %p38
      %p40 = scmp.ne.s32.totalorder %s29, %s30
      %p41 = scmp.eq.s32.totalorder %s21, 0
      %p42 = por %p40, %p41
      %p43 = scmp.ne.s32.totalorder %s29, %s30
      %p44 = scmp.eq.s32.totalorder %s22, 1
      %p45 = por %p43, %p44
      %p47 = scmp.ne.s32.totalorder %s30, %s46
      %p48 = scmp.eq.s32.totalorder %s22, 0
      %p49 = por %p47, %p48
      %s51 = sadd.s32 %s50, 1
      %p54 = scmp.eq.s32.totalorder %s16, 1
      %p55 = scmp.ne.s32.totalorder %s50, %s52
      %p56 = scmp.eq.s32.totalorder %s16, 0
      %p57 = por %p55, %p56
      %p58 = scmp.ne.s32.totalorder %s50, %s52
      %p59 = scmp.eq.s32.totalorder %s21, 1
      %p60 = por %p58, %p59
      %p61 = scmp.ne.s32.totalorder %s52, %s53
      %p62 = scmp.eq.s32.totalorder %s21, 0
      %p63 = por %p61, %p62
      %p64 = scmp.ne.s32.totalorder %s52, %s53
      %p65 = scmp.eq.s32.totalorder %s22, 1
      %p66 = por %p64, %p65
      %p68 = scmp.ne.s32.totalorder %s53, %s67
      %p69 = scmp.eq.s32.totalorder %s22, 0
      %p70 = por %p68, %p69
      %s72 = sadd.s32 %s71, 1
      %p75 = scmp.eq.s32.totalorder %s16, 1
      %p76 = scmp.ne.s32.totalorder %s71, %s73
      %p77 = scmp.eq.s32.totalorder %s16, 0
      %p78 = por %p76, %p77
      %p79 = scmp.ne.s32.totalorder %s71, %s73
      %p80 = scmp.eq.s32.totalorder %s21, 1
      %p81 = por %p79, %p80
      %p82 = scmp.ne.s32.totalorder %s73, %s74
      %p83 = scmp.eq.s32.totalorder %s21, 0
      %p84 = por %p82, %p83
      %p85 = scmp.ne.s32.totalorder %s73, %s74
      %p86 = scmp.eq.s32.totalorder %s22, 1
      %p87 = por %p85, %p86
      %p89 = scmp.ne.s32.totalorder %s74, %s88
      %p90 = scmp.eq.s32.totalorder %s22, 0
      %p91 = por %p89, %p90
      %s92 = ssub.s32 %s16, %s23
      %p93 = scmp.eq.s32.totalorder %s92, 0
      %s95 = sadd.s32 %s94, 1
      %s96 = scalar_select %p93, %s94, %s95
      %p99 = pneg %p93
      %p100 = scmp.eq.s32.totalorder %s16, 1
      %p101 = por %p99, %p100
      %p102 = scmp.ne.s32.totalorder %s94, %s97
      %p103 = scmp.eq.s32.totalorder %s16, 0
      %p104 = por %p102, %p103
      %p105 = scmp.ne.s32.totalorder %s94, %s97
      %p106 = scmp.eq.s32.totalorder %s21, 1
      %p107 = por %p105, %p106
      %p108 = scmp.ne.s32.totalorder %s97, %s98
      %p109 = scmp.eq.s32.totalorder %s21, 0
      %p110 = por %p108, %p109
      %p111 = scmp.ne.s32.totalorder %s97, %s98
      %p112 = scmp.eq.s32.totalorder %s22, 1
      %p113 = por %p111, %p112
      %p115 = scmp.ne.s32.totalorder %s98, %s114
      %p116 = scmp.eq.s32.totalorder %s22, 0
      %p117 = por %p115, %p116
      %p118 = scmp.le.s32.totalorder 1, %s16
      %p119 = scmp.lt.s32.totalorder %s16, 3
      %p120 = pnand %p118, %p119
      %p121 = pneg %p120
      // Predicated region
      $region9: #{rgcn_layer_forward.1} parent=5 // pred_check
        _
      $region10: #{rgcn_layer_forward.1} parent=5 // pred_check_branch
        %123 = sbr.rel (%p120) target = $region12
      $region11: #{rgcn_layer_forward.1} parent=5 // pred_region
        %s124 = ssub.s32 %s16, 1
        // Predicated region
        $region13: #{rgcn_layer_forward.1} parent=11 // pred_check
          %p125 = pneg %p63
        $region14: #{rgcn_layer_forward.1} parent=11 // pred_check_branch
          %127 = sbr.rel (%p125) target = $region16
        $region15: #{rgcn_layer_forward.1} parent=11 // pred_region
          %129 = vsyncadd [#allocation6], 0
          %s130 = sshll.u32 %s1, 4
          %s131 = int_to_ptr.hbm [resolvable:$true] %s130
          %s132 = sshll.u32 [#allocation5], 4
          %s133 = int_to_ptr.vmem [resolvable:$true] %s132
          %138 = dma.hbm_to_vmem [thread:$0]  %s131, 2048, %s133, [#allocation6], 128, 128, 8
        $region16: #{rgcn_layer_forward.1} parent=11 // pred_fallthru
          _
        // Predicated region
        $region17: #{rgcn_layer_forward.1} parent=11 // pred_check
          %p139 = pneg %p84
        $region18: #{rgcn_layer_forward.1} parent=11 // pred_check_branch
          %141 = sbr.rel (%p139) target = $region20
        $region19: #{rgcn_layer_forward.1} parent=11 // pred_region
          _
        $region20: #{rgcn_layer_forward.1} parent=11 // pred_fallthru
          _
      $region12: #{rgcn_layer_forward.1} parent=5 // pred_fallthru
        _
      %p142 = scmp.lt.s32.totalorder %s16, 2
      // Predicated region
      $region21: #{rgcn_layer_forward.1} parent=5 // pred_check
        %p143 = pneg %p142
      $region22: #{rgcn_layer_forward.1} parent=5 // pred_check_branch
        %145 = sbr.rel (%p143) target = $region24
      $region23: #{rgcn_layer_forward.1} parent=5 // pred_region
        // Predicated region
        $region25: #{rgcn_layer_forward.1} parent=23 // pred_check
          %p146 = pneg %p36
        $region26: #{rgcn_layer_forward.1} parent=23 // pred_check_branch
          %148 = sbr.rel (%p146) target = $region28
        $region27: #{rgcn_layer_forward.1} parent=23 // pred_region
          %s149 = sand.u32 %s26, 1
          %s150 = scalar_lea.sflag [#allocation3], %s149
          %s151 = sand.u32 %s26, 1
          %s152 = smul.addr %s151, 32
          %s153 = scalar_lea.vmem [#allocation2], %s152
          %s154 = smul.u32 4, %s16
          %156 = vsyncadd %s150, 0
          %s157 = smul.addr %s154, 8
          %s158 = scalar_lea.hbm %s0, %s157
          %s159 = sshll.u32 %s158, 4
          %s160 = int_to_ptr.hbm [resolvable:$true] %s159
          %s161 = sshll.u32 %s153, 4
          %s162 = int_to_ptr.vmem [resolvable:$true] %s161
          %167 = dma.hbm_to_vmem [thread:$0]  %s160, 512, %s162, %s150, 128, 128, 8
        $region28: #{rgcn_layer_forward.1} parent=23 // pred_fallthru
          _
      $region24: #{rgcn_layer_forward.1} parent=5 // pred_fallthru
        _
      %p168 = scmp.le.s32.totalorder 1, %s16
      %p169 = scmp.lt.s32.totalorder %s16, 3
      %p170 = pnand %p168, %p169
      %p171 = pneg %p170
      // Predicated region
      $region29: #{rgcn_layer_forward.1} parent=5 // pred_check
        _
      $region30: #{rgcn_layer_forward.1} parent=5 // pred_check_branch
        %173 = sbr.rel (%p170) target = $region32
      $region31: #{rgcn_layer_forward.1} parent=5 // pred_region
        %s174 = ssub.s32 %s16, 1
        %s175 = sand.u32 %s29, 1
        %s176 = scalar_lea.sflag [#allocation3], %s175
        %s177 = sand.u32 %s29, 1
        %s178 = smul.addr %s177, 32
        %s179 = scalar_lea.vmem [#allocation2], %s178
        // Predicated region
        $region33: #{rgcn_layer_forward.1} parent=31 // pred_check
          %p180 = pneg %p42
        $region34: #{rgcn_layer_forward.1} parent=31 // pred_check_branch
          %182 = sbr.rel (%p180) target = $region36
        $region35: #{rgcn_layer_forward.1} parent=31 // pred_region
          %184 = dma.done %s176, 512
        $region36: #{rgcn_layer_forward.1} parent=31 // pred_fallthru
          _
        // Predicated region
        $region37: #{rgcn_layer_forward.1} parent=31 // pred_check
          %p185 = pneg %p63
        $region38: #{rgcn_layer_forward.1} parent=31 // pred_check_branch
          %187 = sbr.rel (%p185) target = $region40
        $region39: #{rgcn_layer_forward.1} parent=31 // pred_region
          %189 = dma.done [#allocation6], 2048
        $region40: #{rgcn_layer_forward.1} parent=31 // pred_fallthru
          _
        %s190 = sand.u32 %s29, 1
        %s191 = scalar_lea.sflag [#allocation3], %s190
        %s192 = sand.u32 %s29, 1
        %s193 = smul.addr %s192, 32
        %s194 = scalar_lea.vmem [#allocation2], %s193
        %p195 = pneg %p42
        %p196 = pneg %p39
        %p197 = pneg %p63
        %p198 = pneg %p60
        %p199 = pneg %p84
        %p200 = pneg %p81
        %p201 = pneg %p110
        %p202 = pneg %p107
        %s203 = sand.u32 %s97, 1
        %s204 = scalar_lea.sflag [#allocation4], %s203
        %s205 = sand.u32 %s97, 1
        %s206 = smul.addr %s205, 32
        %s207 = scalar_lea.vmem [#allocation7], %s206
        %s208 = smul.u32 4, %s21
        %s209 = smul.u32 4, %s21
        %v210 = vld [vmem:[%s179] sm:$0xff]
        %v211 = vld [vmem:[%s179 + $0x8] sm:$0xff]
        %v212 = vld [vmem:[%s179 + $0x10] sm:$0xff]
        %v213 = vld [vmem:[%s179 + $0x18] sm:$0xff]
        %v214 = vld [vmem:[#allocation5] sm:$0xff]
        %v215 = vld [vmem:[#allocation5 + $0x8] sm:$0xff]
        %v216 = vld [vmem:[#allocation5 + $0x10] sm:$0xff]
        %v217 = vld [vmem:[#allocation5 + $0x18] sm:$0xff]
        %v218 = vld [vmem:[#allocation5 + $0x20] sm:$0xff]
        %v219 = vld [vmem:[#allocation5 + $0x28] sm:$0xff]
        %v220 = vld [vmem:[#allocation5 + $0x30] sm:$0xff]
        %v221 = vld [vmem:[#allocation5 + $0x38] sm:$0xff]
        %v222 = vld [vmem:[#allocation5 + $0x40] sm:$0xff]
        %v223 = vld [vmem:[#allocation5 + $0x48] sm:$0xff]
        %v224 = vld [vmem:[#allocation5 + $0x50] sm:$0xff]
        %v225 = vld [vmem:[#allocation5 + $0x58] sm:$0xff]
        %v226 = vld [vmem:[#allocation5 + $0x60] sm:$0xff]
        %v227 = vld [vmem:[#allocation5 + $0x68] sm:$0xff]
        %v228 = vld [vmem:[#allocation5 + $0x70] sm:$0xff]
        %v229 = vld [vmem:[#allocation5 + $0x78] sm:$0xff]
        %v230 = vld [vmem:[%s2] sm:$0x1]
        %v232 = vperm.slane %v230, 0
        %234 = vmatpush.msra.mxu0 %v229
        %235 = vmatpush.msra.mxu0 %v228
        %236 = vmatpush.msra.mxu0 %v227
        %237 = vmatpush.msra.mxu0 %v226
        %238 = vmatpush.msra.mxu0 %v225
        %239 = vmatpush.msra.mxu0 %v224
        %240 = vmatpush.msra.mxu0 %v223
        %241 = vmatpush.msra.mxu0 %v222
        %242 = vmatpush.msra.mxu0 %v221
        %243 = vmatpush.msra.mxu0 %v220
        %244 = vmatpush.msra.mxu0 %v219
        %245 = vmatpush.msra.mxu0 %v218
        %246 = vmatpush.msra.mxu0 %v217
        %247 = vmatpush.msra.mxu0 %v216
        %248 = vmatpush.msra.mxu0 %v215
        %249 = vmatpush.msra.mxu0 %v214
        %250 = vmatmul.f32.gmra.mxu0 %v210
        %v251 = vpop.f32.mrf.mxu0
        %v252 = vadd.f32 %v232, %v251
        %253 = vmatmul.f32.gmra.mxu0 %v211
        %v254 = vpop.f32.mrf.mxu0
        %v255 = vadd.f32 %v232, %v254
        %256 = vmatmul.f32.gmra.mxu0 %v212
        %v257 = vpop.f32.mrf.mxu0
        %v258 = vadd.f32 %v232, %v257
        %259 = vmatmul.f32.gmra.mxu0 %v213
        %v260 = vpop.f32.mrf.mxu0
        %v261 = vadd.f32 %v232, %v260
        %262 = vdwg.mxu0
        %v263 = vmax.f32 %v252, 0.0
        %v264 = vmax.f32 %v255, 0.0
        %v265 = vmax.f32 %v258, 0.0
        %v266 = vmax.f32 %v261, 0.0
        %267 = vst [vmem:[%s207] sm:$0xff] %v263
        %268 = vst [vmem:[%s207 + $0x8] sm:$0xff] %v264
        %269 = vst [vmem:[%s207 + $0x10] sm:$0xff] %v265
        %270 = vst [vmem:[%s207 + $0x18] sm:$0xff] %v266
        %s271 = sand.u32 %s97, 1
        %s272 = scalar_lea.sflag [#allocation4], %s271
        %s273 = sand.u32 %s97, 1
        %s274 = smul.addr %s273, 32
        %s275 = scalar_lea.vmem [#allocation7], %s274
        // Predicated region
        $region41: #{rgcn_layer_forward.1} parent=31 // pred_check
          %p276 = pneg %p107
        $region42: #{rgcn_layer_forward.1} parent=31 // pred_check_branch
          %278 = sbr.rel (%p276) target = $region44
        $region43: #{rgcn_layer_forward.1} parent=31 // pred_region
          %s279 = smul.u32 4, %s21
          %281 = vsyncadd %s272, 0
          %s282 = smul.addr %s279, 8
          %s283 = scalar_lea.hbm %s3, %s282
          %s284 = sshll.u32 %s275, 4
          %s285 = int_to_ptr.vmem [resolvable:$true] %s284
          %s286 = sshll.u32 %s283, 4
          %s287 = int_to_ptr.hbm [resolvable:$true] %s286
          %292 = dma.vmem_to_hbm [thread:$0]  %s285, 512, %s287, %s272, 128, 128, 8
        $region44: #{rgcn_layer_forward.1} parent=31 // pred_fallthru
          _
      $region32: #{rgcn_layer_forward.1} parent=5 // pred_fallthru
        _
      %p293 = scmp.le.s32.totalorder 2, %s16
      // Predicated region
      $region45: #{rgcn_layer_forward.1} parent=5 // pred_check
        %p294 = pneg %p293
      $region46: #{rgcn_layer_forward.1} parent=5 // pred_check_branch
        %296 = sbr.rel (%p294) target = $region48
      $region47: #{rgcn_layer_forward.1} parent=5 // pred_region
        %s297 = ssub.s32 %s16, 2
        // Predicated region
        $region49: #{rgcn_layer_forward.1} parent=47 // pred_check
          %p298 = pneg %p113
        $region50: #{rgcn_layer_forward.1} parent=47 // pred_check_branch
          %300 = sbr.rel (%p298) target = $region52
        $region51: #{rgcn_layer_forward.1} parent=47 // pred_region
          %s301 = sand.u32 %s98, 1
          %s302 = scalar_lea.sflag [#allocation4], %s301
          %s303 = sand.u32 %s98, 1
          %s304 = smul.addr %s303, 32
          %s305 = scalar_lea.vmem [#allocation7], %s304
          %307 = dma.done %s302, 512
        $region52: #{rgcn_layer_forward.1} parent=47 // pred_fallthru
          _
      $region48: #{rgcn_layer_forward.1} parent=5 // pred_fallthru
        _
    $region6: #{rgcn_layer_forward.1} parent=1 // loop_footer
      %s20 = sadd.s32 1, %s16
    $region7: #{rgcn_layer_forward.1} parent=1 // loop_footer_branch
      %15 = sbr.rel target = $region3
    $region8: #{rgcn_layer_forward.1} parent=1 // loop_exit
      _
    %308 = vsyncpa [#allocation3], 1
    %s309 = scalar_lea.sflag [#allocation3], 1
    %310 = vsyncpa %s309, 1
    %311 = vsyncpa [#allocation6], 1
    %312 = vsyncpa [#allocation4], 1
    %s313 = scalar_lea.sflag [#allocation4], 1
    %314 = vsyncpa %s313, 1

</llo_original>
